<compile_context>
chip_gen: v7x
topology: tpu7x:2x2x1
jax: 0.10.0
libtpu: 0.0.40
codegen_flags: <defaults>
</compile_context>

<pallas_src>
import functools

import jax
import jax.numpy as jnp
from jax.experimental import pallas as pl
from jax.experimental.pallas import tpu as pltpu


def feedforward_kernel(x_ref, w1_ref, b1_ref, w2_ref, b2_ref, o_ref):
    # x_ref : (1, C_in, TM)   streaming activation tile (channel-major)
    # w1_ref: (C_out, C_in)   BN1-scale-folded conv1 weight (VMEM-resident)
    # b1_ref: (C_out, 1)      folded BN1 bias, f32
    # w2_ref: (C_out, C_out)  BN2-scale-folded conv2 weight (VMEM-resident)
    # b2_ref: (C_out, 1)      folded BN2 bias, f32
    # o_ref : (1, C_out, TM)
    x = x_ref[0]                                                        # (C_in, TM)

    # Block 1: 1x1 conv (channel-major matmul, f32 acc) -> bias -> ReLU
    h = jnp.dot(w1_ref[...], x, preferred_element_type=jnp.float32)     # (C_out, TM) f32
    h = jnp.maximum(h + b1_ref[...], 0.0)

    # Block 2: feed MXU in the weights' dtype, f32 acc -> bias -> ReLU
    h = h.astype(w2_ref.dtype)
    y = jnp.dot(w2_ref[...], h, preferred_element_type=jnp.float32)     # (C_out, TM) f32
    y = jnp.maximum(y + b2_ref[...], 0.0)

    # Single bulk, lane-dense store (v5e has only 1 vst slot).
    o_ref[0] = y.astype(o_ref.dtype)


def _round_down_128(v):
    return max(128, (v // 128) * 128)


def feedforward_pallas(x_nchw, w1, s1, b1, w2, s2, b2, *, out_dtype=None, tile_m=None):
    """x_nchw: (B, C_in, H, W).
    w1: (C_out, C_in), w2: (C_out, C_out)  (PyTorch 1x1 conv weights, spatial
    dims squeezed -- already in channel-major matmul orientation).
    s*/b*: (C_out,) folded inference-mode BN scale/bias.
    Returns (B, C_out, H, W), dtype = out_dtype or x.dtype."""
    B, C_in, H, W = x_nchw.shape
    C_out = w1.shape[0]
    M = H * W
    out_dtype = out_dtype or x_nchw.dtype
    w_dtype = w1.dtype

    io_bytes = jnp.dtype(x_nchw.dtype).itemsize
    ob = jnp.dtype(out_dtype).itemsize
    wb = jnp.dtype(w_dtype).itemsize

    # ---- VMEM budget & tile sizing (explicit vmem_limit_bytes) ----
    try:
        vmem_physical = pltpu.get_tpu_info().vmem_capacity_bytes
    except Exception:
        vmem_physical = 64 * 1024 * 1024   # conservative: v7x per-TC VMEM
    vmem_limit = int(vmem_physical * 0.75)

    # Resident operands (single-buffered weights + tiny f32 bias columns).
    resident_bytes = (C_out * C_in + C_out * C_out) * wb + 4 * C_out * 4
    # Per spatial column: X double-buffered, Y double-buffered, f32 intermediates.
    per_col = 2 * C_in * io_bytes + 2 * C_out * ob + 2 * C_out * 4
    budget = int(vmem_limit * 0.85) - resident_bytes
    tm_cap = max(128, budget // per_col)
    if tile_m is not None:
        tm_cap = min(tm_cap, tile_m)

    tm = M if M <= tm_cap else _round_down_128(min(tm_cap, M))

    # Megacore occupancy (v7x: 2 TensorCores): ensure the grid has >= 2 blocks.
    if B * pl.cdiv(M, tm) < 2 and M > 128:
        tm = _round_down_128(M // 2)

    grid = (B, pl.cdiv(M, tm))

    # ---- Fold BN: scale into weights (in f32, then cast), bias as f32 column ----
    w1f = (s1.astype(jnp.float32)[:, None] * w1.astype(jnp.float32)).astype(w_dtype)
    w2f = (s2.astype(jnp.float32)[:, None] * w2.astype(jnp.float32)).astype(w_dtype)
    b1c = b1.reshape(C_out, 1).astype(jnp.float32)
    b2c = b2.reshape(C_out, 1).astype(jnp.float32)

    # Free reshape: NCHW -> (B, C_in, M).  No transpose anywhere.
    x_flat = x_nchw.reshape(B, C_in, M)

    # Resident operands: single-buffered (no point double-buffering constants).
    resident_kwargs = dict(pipeline_mode=pl.Buffered(1)) if hasattr(pl, "Buffered") else {}

    def _resident(shape):
        return pl.BlockSpec(shape, lambda b, m: (0,) * len(shape), **resident_kwargs)

    # Streaming X: deepen buffering only when tiles are small enough that per-DMA
    # latency is exposed (and there are enough m-steps to benefit).
    x_kwargs = {}
    if hasattr(pl, "Buffered") and tm <= 1024 and pl.cdiv(M, tm) >= 3:
        x_kwargs = dict(pipeline_mode=pl.Buffered(3))
    x_spec = pl.BlockSpec((1, C_in, tm), lambda b, m: (b, 0, m), **x_kwargs)

    # Advisory cost estimate for XLA scheduling around the (mem-bound) call.
    flops = 2 * B * M * (C_out * C_in + C_out * C_out) + 4 * B * M * C_out
    bytes_accessed = (B * M * (C_in * io_bytes + C_out * ob)
                      + C_out * (C_in + C_out) * wb + 4 * C_out * 4)
    cost = pl.CostEstimate(flops=flops, transcendentals=0, bytes_accessed=bytes_accessed)

    out_flat = pl.pallas_call(
        feedforward_kernel,
        out_shape=jax.ShapeDtypeStruct((B, C_out, M), out_dtype),
        grid_spec=pltpu.PrefetchScalarGridSpec(
            num_scalar_prefetch=0,
            grid=grid,
            in_specs=[
                x_spec,                       # X tile (streams)
                _resident((C_out, C_in)),     # W1 * s1 (resident)
                _resident((C_out, 1)),        # bias1
                _resident((C_out, C_out)),    # W2 * s2 (resident)
                _resident((C_out, 1)),        # bias2
            ],
            out_specs=pl.BlockSpec((1, C_out, tm), lambda b, m: (b, 0, m)),
        ),
        compiler_params=pltpu.CompilerParams(
            # Every (batch, spatial-tile) block is independent.
            dimension_semantics=("parallel", "parallel"),
            vmem_limit_bytes=vmem_limit),
        cost_estimate=cost,
    )(x_flat, w1f, b1c, w2f, b2c)

    return out_flat.reshape(B, C_out, H, W)


def fold_bn(gamma, beta, running_mean, running_var, eps=1e-5):
    scale = gamma / jnp.sqrt(running_var + eps)
    bias = beta - running_mean * scale
    return scale, bias


def feedforward_ref(x_nchw, w1, s1, b1, w2, s2, b2):
    """Pure-JAX f32 reference (same math as the PyTorch module, channel-major)."""
    B, C_in, H, W = x_nchw.shape
    C_out = w1.shape[0]
    xf = x_nchw.reshape(B, C_in, H * W).astype(jnp.float32)
    h = jnp.einsum("oc,bcm->bom", w1.astype(jnp.float32), xf)
    h = jnp.maximum(h * s1[None, :, None] + b1[None, :, None], 0.0)
    y = jnp.einsum("oc,bcm->bom", w2.astype(jnp.float32), h)
    y = jnp.maximum(y * s2[None, :, None] + b2[None, :, None], 0.0)
    return y.reshape(B, C_out, H, W)


if __name__ == "__main__":
    key = jax.random.PRNGKey(0)
    B, C_in, H, W = 2, 4, 16, 16          # FeedForward(dim=4, out_dim=32)
    C_out = 32

    ks = jax.random.split(key, 9)
    x = jax.random.normal(ks[0], (B, C_in, H, W), dtype=jnp.float32)

    # Conv weights: PyTorch (out_ch, in_ch, 1, 1) with 1x1 squeezed -> (C_out, C_in).
    w1 = jax.random.normal(ks[1], (C_out, C_in), dtype=jnp.float32) * (1.0 / jnp.sqrt(C_in))
    w2 = jax.random.normal(ks[2], (C_out, C_out), dtype=jnp.float32) * (1.0 / jnp.sqrt(C_out))

    # BatchNorm params (deterministic, non-trivial), inference-mode running stats.
    gamma1 = 1.0 + 0.1 * jax.random.normal(ks[3], (C_out,), dtype=jnp.float32)
    beta1 = 0.1 * jax.random.normal(ks[4], (C_out,), dtype=jnp.float32)
    rmean1 = 0.05 * jax.random.normal(ks[5], (C_out,), dtype=jnp.float32)
    rvar1 = jnp.abs(1.0 + 0.1 * jax.random.normal(ks[6], (C_out,), dtype=jnp.float32))

    gamma2 = 1.0 + 0.1 * jax.random.normal(ks[7], (C_out,), dtype=jnp.float32)
    beta2 = 0.1 * jax.random.normal(ks[8], (C_out,), dtype=jnp.float32)
    rmean2 = jnp.zeros((C_out,), dtype=jnp.float32)
    rvar2 = jnp.ones((C_out,), dtype=jnp.float32)

    s1, b1 = fold_bn(gamma1, beta1, rmean1, rvar1)
    s2, b2 = fold_bn(gamma2, beta2, rmean2, rvar2)

    ff = jax.jit(functools.partial(feedforward_pallas))

    # --- f32 path (matches PyTorch module semantics) ---
    out = jax.block_until_ready(ff(x, w1, s1, b1, w2, s2, b2))
    ref = feedforward_ref(x, w1, s1, b1, w2, s2, b2)
    assert out.shape == (B, C_out, H, W)
    assert jnp.allclose(out, ref, atol=1e-4, rtol=1e-4), "f32 mismatch vs reference"

    # --- bf16 activation/weight path (recommended production default: halves HBM traffic) ---
    # NOTE: the post-BN/ReLU hidden is downcast to bf16 before the second matmul;
    # this intentionally differs from an f32 PyTorch module at bf16-level tolerance.
    out_bf16 = jax.block_until_ready(
        ff(x.astype(jnp.bfloat16), w1.astype(jnp.bfloat16), s1, b1,
           w2.astype(jnp.bfloat16), s2, b2))
    assert jnp.allclose(out_bf16.astype(jnp.float32), ref, atol=1e-1, rtol=5e-2), \
        "bf16 mismatch vs reference"

    print("KERNEL_OK")
</pallas_src>

<mosaic_0001>
module attributes {stable_mosaic.version = 11 : i64} {
  func.func @feedforward_kernel(%arg0: i32, %arg1: i32, %arg2: memref<1x4x256xf32, #tpu.memory_space<vmem>>, %arg3: memref<32x4xf32, #tpu.memory_space<vmem>>, %arg4: memref<32x1xf32, #tpu.memory_space<vmem>>, %arg5: memref<32x32xf32, #tpu.memory_space<vmem>>, %arg6: memref<32x1xf32, #tpu.memory_space<vmem>>, %arg7: memref<1x32x256xf32, #tpu.memory_space<vmem>>) attributes {dimension_semantics = [#tpu.dimension_semantics<parallel>, #tpu.dimension_semantics<parallel>], iteration_bounds = array<i64: 2, 1>, scalar_prefetch = 0 : i64, scratch_operands = 0 : i64, tpu.core_type = #tpu.core_type<tc>, window_params = [{transform_indices = @transform_0, window_bounds = array<i64: 1, 4, 256>}, {pipeline_mode = #tpu.pipeline_mode<synchronous>, transform_indices = @transform_1, window_bounds = array<i64: 32, 4>}, {pipeline_mode = #tpu.pipeline_mode<synchronous>, transform_indices = @transform_2, window_bounds = array<i64: 32, 1>}, {pipeline_mode = #tpu.pipeline_mode<synchronous>, transform_indices = @transform_3, window_bounds = array<i64: 32, 32>}, {pipeline_mode = #tpu.pipeline_mode<synchronous>, transform_indices = @transform_4, window_bounds = array<i64: 32, 1>}, {transform_indices = @transform_5, window_bounds = array<i64: 1, 32, 256>}]} {
    %c0 = arith.constant 0 : index
    %c0_0 = arith.constant 0 : index
    %c0_1 = arith.constant 0 : index
    %0 = vector.load %arg2[%c0, %c0_0, %c0_1] : memref<1x4x256xf32, #tpu.memory_space<vmem>>, vector<1x4x256xf32>
    %1 = vector.shape_cast %0 : vector<1x4x256xf32> to vector<4x256xf32>
    %c0_2 = arith.constant 0 : index
    %c0_3 = arith.constant 0 : index
    %2 = vector.load %arg3[%c0_2, %c0_3] : memref<32x4xf32, #tpu.memory_space<vmem>>, vector<32x4xf32>
    %cst = arith.constant dense<0.000000e+00> : vector<32x256xf32>
    %3 = tpu.matmul %2, %1, %cst {dimension_numbers = #tpu.dot_dimension_numbers<[1], [0], [0], [1], [0, 0, 1, 1], [], []>} : vector<32x4xf32>, vector<4x256xf32>, vector<32x256xf32> -> vector<32x256xf32>
    %c0_4 = arith.constant 0 : index
    %c0_5 = arith.constant 0 : index
    %4 = vector.load %arg4[%c0_4, %c0_5] : memref<32x1xf32, #tpu.memory_space<vmem>>, vector<32x1xf32>
    %5 = vector.broadcast %4 : vector<32x1xf32> to vector<32x256xf32>
    %6 = arith.addf %3, %5 : vector<32x256xf32>
    %cst_6 = arith.constant 0.000000e+00 : f32
    %7 = vector.broadcast %cst_6 : f32 to vector<32x256xf32>
    %8 = arith.maximumf %6, %7 : vector<32x256xf32>
    %c0_7 = arith.constant 0 : index
    %c0_8 = arith.constant 0 : index
    %9 = vector.load %arg5[%c0_7, %c0_8] : memref<32x32xf32, #tpu.memory_space<vmem>>, vector<32x32xf32>
    %cst_9 = arith.constant dense<0.000000e+00> : vector<32x256xf32>
    %10 = tpu.matmul %9, %8, %cst_9 {dimension_numbers = #tpu.dot_dimension_numbers<[1], [0], [0], [1], [0, 0, 1, 1], [], []>} : vector<32x32xf32>, vector<32x256xf32>, vector<32x256xf32> -> vector<32x256xf32>
    %c0_10 = arith.constant 0 : index
    %c0_11 = arith.constant 0 : index
    %11 = vector.load %arg6[%c0_10, %c0_11] : memref<32x1xf32, #tpu.memory_space<vmem>>, vector<32x1xf32>
    %12 = vector.broadcast %11 : vector<32x1xf32> to vector<32x256xf32>
    %13 = arith.addf %10, %12 : vector<32x256xf32>
    %cst_12 = arith.constant 0.000000e+00 : f32
    %14 = vector.broadcast %cst_12 : f32 to vector<32x256xf32>
    %15 = arith.maximumf %13, %14 : vector<32x256xf32>
    %c0_13 = arith.constant 0 : index
    %c0_14 = arith.constant 0 : index
    %c0_15 = arith.constant 0 : index
    %16 = vector.load %arg7[%c0_13, %c0_14, %c0_15] : memref<1x32x256xf32, #tpu.memory_space<vmem>>, vector<1x32x256xf32>
    %17 = vector.shape_cast %16 : vector<1x32x256xf32> to vector<32x256xf32>
    %18 = vector.shape_cast %15 : vector<32x256xf32> to vector<1x32x256xf32>
    tpu.vector_store %arg7[%c0_13, %c0_14, %c0_15], %18 {strides = array<i32>} : memref<1x32x256xf32, #tpu.memory_space<vmem>>, vector<1x32x256xf32>,
    return
  }
  func.func @transform_0(%arg0: i32, %arg1: i32) -> (i32, i32, i32) {
    %c0_i32 = arith.constant 0 : i32
    %c0_i32_0 = arith.constant 0 : i32
    return %arg0, %c0_i32, %arg1 : i32, i32, i32
  }
  func.func @transform_1(%arg0: i32, %arg1: i32) -> (i32, i32) {
    %c0_i32 = arith.constant 0 : i32
    %c0_i32_0 = arith.constant 0 : i32
    %c0_i32_1 = arith.constant 0 : i32
    return %c0_i32, %c0_i32_0 : i32, i32
  }
  func.func @transform_2(%arg0: i32, %arg1: i32) -> (i32, i32) {
    %c0_i32 = arith.constant 0 : i32
    %c0_i32_0 = arith.constant 0 : i32
    %c0_i32_1 = arith.constant 0 : i32
    return %c0_i32, %c0_i32_0 : i32, i32
  }
  func.func @transform_3(%arg0: i32, %arg1: i32) -> (i32, i32) {
    %c0_i32 = arith.constant 0 : i32
    %c0_i32_0 = arith.constant 0 : i32
    %c0_i32_1 = arith.constant 0 : i32
    return %c0_i32, %c0_i32_0 : i32, i32
  }
  func.func @transform_4(%arg0: i32, %arg1: i32) -> (i32, i32) {
    %c0_i32 = arith.constant 0 : i32
    %c0_i32_0 = arith.constant 0 : i32
    %c0_i32_1 = arith.constant 0 : i32
    return %c0_i32, %c0_i32_0 : i32, i32
  }
  func.func @transform_5(%arg0: i32, %arg1: i32) -> (i32, i32, i32) {
    %c0_i32 = arith.constant 0 : i32
    %c0_i32_0 = arith.constant 0 : i32
    return %arg0, %c0_i32, %arg1 : i32, i32, i32
  }
}

</mosaic_0001>

<llo_original>
// kernel: feedforward_pallas.1
$region0: #{feedforward_pallas.1}
  #allocation0 [shape = 'u32[]', space=smem, size = 0x4, offset = 0x4, fixed_abs, tag = 'smem constant byte address 0x4 - core index']
  #allocation1 [shape = 'u32[144,128]{1,0:T(1,128)}', space=vmem, size = 0x12000, scoped, tag = 'internal scratch']
  %s0 = inlined_call_operand.vmem [shape: f32[2,4,256], index: 0, kind: input, shape index: {}]
  %s1 = inlined_call_operand.vmem [shape: f32[32,4], index: 1, kind: input, shape index: {}]
  %s2 = inlined_call_operand.vmem [shape: f32[32,1], index: 2, kind: input, shape index: {}]
  %s3 = inlined_call_operand.vmem [shape: f32[32,32], index: 3, kind: input, shape index: {}]
  %s4 = inlined_call_operand.vmem [shape: f32[32,1], index: 4, kind: input, shape index: {}]
  %s5 = inlined_call_operand.vmem [shape: f32[2,32,256], index: 5, kind: output, shape index: {}]
  %s6 = sld [smem:[#allocation0]]
  $region53: #{feedforward_pallas.1} parent=0
    _
  %s8 = ssub.s32 1, %s6
  %s9 = scalar_select 0, %s8, %s6
  loop: start=0, step=1, limit=4
  $region2: #{feedforward_pallas.1} parent=0 // loop_pre_header
    _
  $region3: #{feedforward_pallas.1} parent=0 // loop_header
    %s11 = sphi 0, %s15
    %p12 = scmp.ge.s32.totalorder %s11, 4
    %s18 = sphi 0, %s30
    %s19 = sphi 0, %s26
    %s20 = sphi 0, %s18
    %s21 = sphi 0, %s19
    %s22 = sphi 0, %s20
    %s23 = sphi 0, %s21
    %s35 = sphi 0, %s37
    %s38 = sphi 0, %s35
    %s39 = sphi 0, %s38
    %s55 = sphi 0, %s39
    %s59 = sphi 0, %s59
    %s61 = sphi 0, %s59
    %s62 = sphi 0, %s61
    %s76 = sphi 0, %s62
    %s80 = sphi 0, %s80
    %s82 = sphi 0, %s80
    %s83 = sphi 0, %s82
    %s97 = sphi 0, %s83
    %s101 = sphi 0, %s101
    %s103 = sphi 0, %s101
    %s104 = sphi 0, %s103
    %s118 = sphi 0, %s104
    %s122 = sphi 0, %s122
    %s124 = sphi 0, %s122
    %s125 = sphi 0, %s124
    %s139 = sphi 0, %s125
    %s147 = sphi 0, %s149
    %s150 = sphi 0, %s147
    %s151 = sphi 0, %s150
    %s167 = sphi 0, %s151
  $region4: #{feedforward_pallas.1} parent=0 // loop_header_branch
    %14 = sbr.rel (%p12) target = $region8
  $region5: #{feedforward_pallas.1} parent=0 // loop_body
    %s16 = ssub.s32 %s11, 1
    %s17 = ssub.s32 %s11, 2
    %s24 = sadd.s32 1, %s19
    %p25 = scmp.ge.s32.totalorder %s24, 1
    %s26 = scalar_select %p25, 0, %s24
    %s27 = sadd.s32 1, %s18
    %s28 = scalar_select %p25, %s27, %s18
    %p29 = scmp.ge.s32.totalorder %s28, 2
    %s30 = scalar_select %p29, 0, %s28
    %s31 = ssub.s32 %s18, %s30
    %s32 = ssub.s32 %s19, %s26
    %s33 = sor.u32 %s31, %s32
    %p34 = scmp.eq.s32.totalorder %s33, 0
    %s36 = sadd.s32 %s35, 1
    %s37 = scalar_select %p34, %s35, %s36
    %p40 = pneg %p34
    %p41 = scmp.eq.s32.totalorder %s11, 1
    %p42 = por %p40, %p41
    %p43 = scmp.ne.s32.totalorder %s35, %s38
    %p44 = scmp.eq.s32.totalorder %s11, 0
    %p45 = por %p43, %p44
    %p46 = scmp.ne.s32.totalorder %s35, %s38
    %p47 = scmp.eq.s32.totalorder %s16, 1
    %p48 = por %p46, %p47
    %p49 = scmp.ne.s32.totalorder %s38, %s39
    %p50 = scmp.eq.s32.totalorder %s16, 0
    %p51 = por %p49, %p50
    %p52 = scmp.ne.s32.totalorder %s38, %s39
    %p53 = scmp.eq.s32.totalorder %s17, 1
    %p54 = por %p52, %p53
    %p56 = scmp.ne.s32.totalorder %s39, %s55
    %p57 = scmp.eq.s32.totalorder %s17, 0
    %p58 = por %p56, %p57
    %s60 = sadd.s32 %s59, 1
    %p63 = scmp.eq.s32.totalorder %s11, 1
    %p64 = scmp.ne.s32.totalorder %s59, %s61
    %p65 = scmp.eq.s32.totalorder %s11, 0
    %p66 = por %p64, %p65
    %p67 = scmp.ne.s32.totalorder %s59, %s61
    %p68 = scmp.eq.s32.totalorder %s16, 1
    %p69 = por %p67, %p68
    %p70 = scmp.ne.s32.totalorder %s61, %s62
    %p71 = scmp.eq.s32.totalorder %s16, 0
    %p72 = por %p70, %p71
    %p73 = scmp.ne.s32.totalorder %s61, %s62
    %p74 = scmp.eq.s32.totalorder %s17, 1
    %p75 = por %p73, %p74
    %p77 = scmp.ne.s32.totalorder %s62, %s76
    %p78 = scmp.eq.s32.totalorder %s17, 0
    %p79 = por %p77, %p78
    %s81 = sadd.s32 %s80, 1
    %p84 = scmp.eq.s32.totalorder %s11, 1
    %p85 = scmp.ne.s32.totalorder %s80, %s82
    %p86 = scmp.eq.s32.totalorder %s11, 0
    %p87 = por %p85, %p86
    %p88 = scmp.ne.s32.totalorder %s80, %s82
    %p89 = scmp.eq.s32.totalorder %s16, 1
    %p90 = por %p88, %p89
    %p91 = scmp.ne.s32.totalorder %s82, %s83
    %p92 = scmp.eq.s32.totalorder %s16, 0
    %p93 = por %p91, %p92
    %p94 = scmp.ne.s32.totalorder %s82, %s83
    %p95 = scmp.eq.s32.totalorder %s17, 1
    %p96 = por %p94, %p95
    %p98 = scmp.ne.s32.totalorder %s83, %s97
    %p99 = scmp.eq.s32.totalorder %s17, 0
    %p100 = por %p98, %p99
    %s102 = sadd.s32 %s101, 1
    %p105 = scmp.eq.s32.totalorder %s11, 1
    %p106 = scmp.ne.s32.totalorder %s101, %s103
    %p107 = scmp.eq.s32.totalorder %s11, 0
    %p108 = por %p106, %p107
    %p109 = scmp.ne.s32.totalorder %s101, %s103
    %p110 = scmp.eq.s32.totalorder %s16, 1
    %p111 = por %p109, %p110
    %p112 = scmp.ne.s32.totalorder %s103, %s104
    %p113 = scmp.eq.s32.totalorder %s16, 0
    %p114 = por %p112, %p113
    %p115 = scmp.ne.s32.totalorder %s103, %s104
    %p116 = scmp.eq.s32.totalorder %s17, 1
    %p117 = por %p115, %p116
    %p119 = scmp.ne.s32.totalorder %s104, %s118
    %p120 = scmp.eq.s32.totalorder %s17, 0
    %p121 = por %p119, %p120
    %s123 = sadd.s32 %s122, 1
    %p126 = scmp.eq.s32.totalorder %s11, 1
    %p127 = scmp.ne.s32.totalorder %s122, %s124
    %p128 = scmp.eq.s32.totalorder %s11, 0
    %p129 = por %p127, %p128
    %p130 = scmp.ne.s32.totalorder %s122, %s124
    %p131 = scmp.eq.s32.totalorder %s16, 1
    %p132 = por %p130, %p131
    %p133 = scmp.ne.s32.totalorder %s124, %s125
    %p134 = scmp.eq.s32.totalorder %s16, 0
    %p135 = por %p133, %p134
    %p136 = scmp.ne.s32.totalorder %s124, %s125
    %p137 = scmp.eq.s32.totalorder %s17, 1
    %p138 = por %p136, %p137
    %p140 = scmp.ne.s32.totalorder %s125, %s139
    %p141 = scmp.eq.s32.totalorder %s17, 0
    %p142 = por %p140, %p141
    %s143 = ssub.s32 %s18, %s30
    %s144 = ssub.s32 %s19, %s26
    %s145 = sor.u32 %s143, %s144
    %p146 = scmp.eq.s32.totalorder %s145, 0
    %s148 = sadd.s32 %s147, 1
    %s149 = scalar_select %p146, %s147, %s148
    %p152 = pneg %p146
    %p153 = scmp.eq.s32.totalorder %s11, 1
    %p154 = por %p152, %p153
    %p155 = scmp.ne.s32.totalorder %s147, %s150
    %p156 = scmp.eq.s32.totalorder %s11, 0
    %p157 = por %p155, %p156
    %p158 = scmp.ne.s32.totalorder %s147, %s150
    %p159 = scmp.eq.s32.totalorder %s16, 1
    %p160 = por %p158, %p159
    %p161 = scmp.ne.s32.totalorder %s150, %s151
    %p162 = scmp.eq.s32.totalorder %s16, 0
    %p163 = por %p161, %p162
    %p164 = scmp.ne.s32.totalorder %s150, %s151
    %p165 = scmp.eq.s32.totalorder %s17, 1
    %p166 = por %p164, %p165
    %p168 = scmp.ne.s32.totalorder %s151, %s167
    %p169 = scmp.eq.s32.totalorder %s17, 0
    %p170 = por %p168, %p169
    %p171 = scmp.le.s32.totalorder 1, %s11
    %p172 = scmp.lt.s32.totalorder %s11, 3
    %p173 = pnand %p171, %p172
    %p174 = pneg %p173
    // Predicated region
    $region9: #{feedforward_pallas.1} parent=5 // pred_check
      _
    $region10: #{feedforward_pallas.1} parent=5 // pred_check_branch
      %176 = sbr.rel (%p173) target = $region12
    $region11: #{feedforward_pallas.1} parent=5 // pred_region
      %s177 = ssub.s32 %s11, 1
      // Predicated region
      $region13: #{feedforward_pallas.1} parent=11 // pred_check
        %p178 = pneg %p72
      $region14: #{feedforward_pallas.1} parent=11 // pred_check_branch
        %180 = sbr.rel (%p178) target = $region16
      $region15: #{feedforward_pallas.1} parent=11 // pred_region
        _
      $region16: #{feedforward_pallas.1} parent=11 // pred_fallthru
        _
      // Predicated region
      $region17: #{feedforward_pallas.1} parent=11 // pred_check
        %p181 = pneg %p93
      $region18: #{feedforward_pallas.1} parent=11 // pred_check_branch
        %183 = sbr.rel (%p181) target = $region20
      $region19: #{feedforward_pallas.1} parent=11 // pred_region
        _
      $region20: #{feedforward_pallas.1} parent=11 // pred_fallthru
        _
      // Predicated region
      $region21: #{feedforward_pallas.1} parent=11 // pred_check
        %p184 = pneg %p114
      $region22: #{feedforward_pallas.1} parent=11 // pred_check_branch
        %186 = sbr.rel (%p184) target = $region24
      $region23: #{feedforward_pallas.1} parent=11 // pred_region
        _
      $region24: #{feedforward_pallas.1} parent=11 // pred_fallthru
        _
      // Predicated region
      $region25: #{feedforward_pallas.1} parent=11 // pred_check
        %p187 = pneg %p135
      $region26: #{feedforward_pallas.1} parent=11 // pred_check_branch
        %189 = sbr.rel (%p187) target = $region28
      $region27: #{feedforward_pallas.1} parent=11 // pred_region
        _
      $region28: #{feedforward_pallas.1} parent=11 // pred_fallthru
        _
    $region12: #{feedforward_pallas.1} parent=5 // pred_fallthru
      _
    %p190 = scmp.lt.s32.totalorder %s11, 2
    // Predicated region
    $region29: #{feedforward_pallas.1} parent=5 // pred_check
      %p191 = pneg %p190
    $region30: #{feedforward_pallas.1} parent=5 // pred_check_branch
      %193 = sbr.rel (%p191) target = $region32
    $region31: #{feedforward_pallas.1} parent=5 // pred_region
      // Predicated region
      $region33: #{feedforward_pallas.1} parent=31 // pred_check
        %p194 = pneg %p45
      $region34: #{feedforward_pallas.1} parent=31 // pred_check_branch
        %196 = sbr.rel (%p194) target = $region36
      $region35: #{feedforward_pallas.1} parent=31 // pred_region
        %s197 = smul.u32 2, %s19
        %p198 = scmp.lt.s32.totalorder %s18, 1
        %s199 = scalar_select %p198, %s18, 1
        %p200 = scmp.lt.s32.totalorder %s197, 1
        %s201 = scalar_select %p200, %s197, 1
        %s202 = smul.addr %s199, 2
        %s203 = sadd.s32 %s201, %s202
        %s204 = smul.addr %s203, 4
        %s205 = scalar_lea.vmem %s0, %s204
        %s206 = smul.u32 2, %s19
      $region36: #{feedforward_pallas.1} parent=31 // pred_fallthru
        _
    $region32: #{feedforward_pallas.1} parent=5 // pred_fallthru
      _
    %p207 = scmp.le.s32.totalorder 1, %s11
    %p208 = scmp.lt.s32.totalorder %s11, 3
    %p209 = pnand %p207, %p208
    %p210 = pneg %p209
    // Predicated region
    $region37: #{feedforward_pallas.1} parent=5 // pred_check
      _
    $region38: #{feedforward_pallas.1} parent=5 // pred_check_branch
      %212 = sbr.rel (%p209) target = $region40
    $region39: #{feedforward_pallas.1} parent=5 // pred_region
      %s213 = ssub.s32 %s11, 1
      %s214 = smul.u32 2, %s21
      %p215 = scmp.lt.s32.totalorder %s20, 1
      %s216 = scalar_select %p215, %s20, 1
      %p217 = scmp.lt.s32.totalorder %s214, 1
      %s218 = scalar_select %p217, %s214, 1
      %s219 = smul.addr %s216, 2
      %s220 = sadd.s32 %s218, %s219
      %s221 = smul.addr %s220, 4
      %s222 = scalar_lea.vmem %s0, %s221
      %p223 = pneg %p51
      %p224 = pneg %p48
      %p225 = pneg %p72
      %p226 = pneg %p69
      %p227 = pneg %p93
      %p228 = pneg %p90
      %p229 = pneg %p114
      %p230 = pneg %p111
      %p231 = pneg %p135
      %p232 = pneg %p132
      %p233 = pneg %p163
      %p234 = pneg %p160
      %s235 = smul.u32 2, %s21
      %p236 = scmp.lt.s32.totalorder %s20, 1
      %s237 = scalar_select %p236, %s20, 1
      %p238 = scmp.lt.s32.totalorder %s235, 1
      %s239 = scalar_select %p238, %s235, 1
      %s240 = smul.addr %s237, 8
      %s241 = sadd.s32 %s239, %s240
      %s242 = smul.addr %s241, 8
      %s243 = scalar_lea.vmem %s5, %s242
      %s244 = smul.u32 2, %s21
      %p245 = scmp.lt.s32.totalorder %s20, 1
      %s246 = scalar_select %p245, %s20, 1
      %p247 = scmp.lt.s32.totalorder %s244, 1
      %s248 = scalar_select %p247, %s244, 1
      %s249 = smul.addr %s246, 2
      %s250 = sadd.s32 %s248, %s249
      %s251 = smul.addr %s250, 4
      %s252 = scalar_lea.vmem %s0, %s251
      %s253 = smul.u32 2, %s21
      %s254 = smul.u32 2, %s21
      %p255 = scmp.lt.s32.totalorder %s20, 1
      %s256 = scalar_select %p255, %s20, 1
      %p257 = scmp.lt.s32.totalorder %s254, 1
      %s258 = scalar_select %p257, %s254, 1
      %s259 = smul.addr %s256, 8
      %s260 = sadd.s32 %s258, %s259
      %s261 = smul.addr %s260, 8
      %s262 = scalar_lea.vmem %s5, %s261
      %s263 = smul.u32 2, %s21
      %v264 = vld [vmem:[%s252] sm:$0xff]
      %v265 = vld [vmem:[%s1] sm:$0xff]
      %v266 = vld [vmem:[%s1 + $0x8] sm:$0xff]
      %v267 = vld [vmem:[%s1 + $0x10] sm:$0xff]
      %v268 = vld [vmem:[%s1 + $0x18] sm:$0xff]
      %v269 = vld [vmem:[%s2] sm:$0xff]
      %v270 = vld [vmem:[%s2 + $0x8] sm:$0xff]
      %v271 = vld [vmem:[%s2 + $0x10] sm:$0xff]
      %v272 = vld [vmem:[%s2 + $0x18] sm:$0xff]
      %274 = vset.pattern.permute.xlu0 0
      %275 = vperm.xlu0 %274, %v269
      %v276 = vpop.permute.xlu0 %275
      %279 = vset.pattern.permute.xlu0 0
      %280 = vperm.xlu0 %279, %v270
      %v281 = vpop.permute.xlu0 %280
      %284 = vset.pattern.permute.xlu0 0
      %285 = vperm.xlu0 %284, %v271
      %v286 = vpop.permute.xlu0 %285
      %289 = vset.pattern.permute.xlu0 0
      %290 = vperm.xlu0 %289, %v272
      %v291 = vpop.permute.xlu0 %290
      %v294 = vcombine.high %v264, %v264
      %vm295 = vcmask 31744
      %v297 = vsel %vm295, %v265, 0
      %v300 = vsel %vm295, %v266, 0
      %v303 = vsel %vm295, %v267, 0
      %v306 = vsel %vm295, %v268, 0
      %vm308 = vcmask 1043456
      %v309 = vsel %vm308, %v264, 0
      %v311 = vsel %vm308, %v294, 0
      %313 = vmatprep.subr.mxu0 %v311
      %314 = vmatpush1.msra.mxu0 %v309
      %315 = vmatprep.subr.mxu0 0.0
      %316 = vmatpush1.msra.mxu0 0.0
      %317 = vmatprep.subr.mxu0 0.0
      %318 = vmatpush1.msra.mxu0 0.0
      %319 = vmatprep.subr.mxu0 0.0
      %320 = vmatpush1.msra.mxu0 0.0
      %321 = vmatprep.subr.mxu0 0.0
      %322 = vmatpush1.msra.mxu0 0.0
      %323 = vmatprep.subr.mxu0 0.0
      %324 = vmatpush1.msra.mxu0 0.0
      %325 = vmatprep.subr.mxu0 0.0
      %326 = vmatpush1.msra.mxu0 0.0
      %327 = vmatprep.subr.mxu0 0.0
      %328 = vmatpush1.msra.mxu0 0.0
      %329 = vmatprep.subr.mxu0 0.0
      %330 = vmatpush1.msra.mxu0 0.0
      %331 = vmatprep.subr.mxu0 0.0
      %332 = vmatpush1.msra.mxu0 0.0
      %333 = vmatprep.subr.mxu0 0.0
      %334 = vmatpush1.msra.mxu0 0.0
      %335 = vmatprep.subr.mxu0 0.0
      %336 = vmatpush1.msra.mxu0 0.0
      %337 = vmatprep.subr.mxu0 0.0
      %338 = vmatpush1.msra.mxu0 0.0
      %339 = vmatprep.subr.mxu0 0.0
      %340 = vmatpush1.msra.mxu0 0.0
      %341 = vmatprep.subr.mxu0 0.0
      %342 = vmatpush1.msra.mxu0 0.0
      %343 = vmatprep.subr.mxu0 0.0
      %344 = vmatpush1.msra.mxu0 0.0
      %345 = vmatprep.subr.mxu0 0.0
      %346 = vmatpush1.msra.mxu0 0.0
      %347 = vmatprep.subr.mxu0 0.0
      %348 = vmatpush1.msra.mxu0 0.0
      %349 = vmatprep.subr.mxu0 0.0
      %350 = vmatpush1.msra.mxu0 0.0
      %351 = vmatprep.subr.mxu0 0.0
      %352 = vmatpush1.msra.mxu0 0.0
      %353 = vmatprep.subr.mxu0 0.0
      %354 = vmatpush1.msra.mxu0 0.0
      %355 = vmatprep.subr.mxu0 0.0
      %356 = vmatpush1.msra.mxu0 0.0
      %357 = vmatprep.subr.mxu0 0.0
      %358 = vmatpush1.msra.mxu0 0.0
      %359 = vmatprep.subr.mxu0 0.0
      %360 = vmatpush1.msra.mxu0 0.0
      %361 = vmatprep.subr.mxu0 0.0
      %362 = vmatpush1.msra.mxu0 0.0
      %363 = vmatprep.subr.mxu0 0.0
      %364 = vmatpush1.msra.mxu0 0.0
      %365 = vmatprep.subr.mxu0 0.0
      %366 = vmatpush1.msra.mxu0 0.0
      %367 = vmatprep.subr.mxu0 0.0
      %368 = vmatpush1.msra.mxu0 0.0
      %369 = vmatprep.subr.mxu0 0.0
      %370 = vmatpush1.msra.mxu0 0.0
      %371 = vmatprep.subr.mxu0 0.0
      %372 = vmatpush1.msra.mxu0 0.0
      %373 = vmatprep.subr.mxu0 0.0
      %374 = vmatpush1.msra.mxu0 0.0
      %375 = vmatprep.subr.mxu0 0.0
      %376 = vmatpush1.msra.mxu0 0.0
      %377 = vmatprep.mubr.f32.mxu0 0.0
      %378 = vmatmul.mubr.f32.gmra.mrb[0].mxu0 %v297
      %v379 = vpop.f32.mrb[0].mxu0
      %v380 = vadd.f32 %v276, %v379
      %v381 = vpop.f32.mrb[0].mxu0
      %v382 = vadd.f32 %v276, %v381
      %383 = vmatprep.mubr.f32.mxu0 0.0
      %384 = vmatmul.mubr.f32.gmra.mrb[0].mxu0 %v300
      %v385 = vpop.f32.mrb[0].mxu0
      %v386 = vadd.f32 %v281, %v385
      %v387 = vpop.f32.mrb[0].mxu0
      %v388 = vadd.f32 %v281, %v387
      %389 = vmatprep.mubr.f32.mxu0 0.0
      %390 = vmatmul.mubr.f32.gmra.mrb[0].mxu0 %v303
      %v391 = vpop.f32.mrb[0].mxu0
      %v392 = vadd.f32 %v286, %v391
      %v393 = vpop.f32.mrb[0].mxu0
      %v394 = vadd.f32 %v286, %v393
      %395 = vmatprep.mubr.f32.mxu0 0.0
      %396 = vmatmul.mubr.f32.gmra.mrb[0].mxu0 %v306
      %v397 = vpop.f32.mrb[0].mxu0
      %v398 = vadd.f32 %v291, %v397
      %v399 = vpop.f32.mrb[0].mxu0
      %v400 = vadd.f32 %v291, %v399
      %401 = vdwg.mxu0
      %v402 = vmax.f32 %v380, 0.0
      %v403 = vmax.f32 %v382, 0.0
      %v404 = vmax.f32 %v386, 0.0
      %v405 = vmax.f32 %v388, 0.0
      %v406 = vmax.f32 %v392, 0.0
      %v407 = vmax.f32 %v394, 0.0
      %v408 = vmax.f32 %v398, 0.0
      %v409 = vmax.f32 %v400, 0.0
      %v410 = vld [vmem:[%s3] sm:$0xff]
      %v411 = vld [vmem:[%s3 + $0x8] sm:$0xff]
      %v412 = vld [vmem:[%s3 + $0x10] sm:$0xff]
      %v413 = vld [vmem:[%s3 + $0x18] sm:$0xff]
      %v414 = vld [vmem:[%s4] sm:$0xff]
      %v415 = vld [vmem:[%s4 + $0x8] sm:$0xff]
      %v416 = vld [vmem:[%s4 + $0x10] sm:$0xff]
      %v417 = vld [vmem:[%s4 + $0x18] sm:$0xff]
      %419 = vset.pattern.permute.xlu0 0
      %420 = vperm.xlu0 %419, %v414
      %v421 = vpop.permute.xlu0 %420
      %424 = vset.pattern.permute.xlu0 0
      %425 = vperm.xlu0 %424, %v415
      %v426 = vpop.permute.xlu0 %425
      %429 = vset.pattern.permute.xlu0 0
      %430 = vperm.xlu0 %429, %v416
      %v431 = vpop.permute.xlu0 %430
      %434 = vset.pattern.permute.xlu0 0
      %435 = vperm.xlu0 %434, %v417
      %v436 = vpop.permute.xlu0 %435
      %vm438 = vcmask 261120
      %v440 = vsel %vm438, %v410, 0
      %v443 = vsel %vm438, %v411, 0
      %v446 = vsel %vm438, %v412, 0
      %v449 = vsel %vm438, %v413, 0
      %451 = vmatprep.subr.mxu0 %v403
      %452 = vmatpush1.msra.mxu0 %v402
      %453 = vmatprep.subr.mxu0 %v405
      %454 = vmatpush1.msra.mxu0 %v404
      %455 = vmatprep.subr.mxu0 %v407
      %456 = vmatpush1.msra.mxu0 %v406
      %457 = vmatprep.subr.mxu0 %v409
      %458 = vmatpush1.msra.mxu0 %v408
      %459 = vmatprep.subr.mxu0 0.0
      %460 = vmatpush1.msra.mxu0 0.0
      %461 = vmatprep.subr.mxu0 0.0
      %462 = vmatpush1.msra.mxu0 0.0
      %463 = vmatprep.subr.mxu0 0.0
      %464 = vmatpush1.msra.mxu0 0.0
      %465 = vmatprep.subr.mxu0 0.0
      %466 = vmatpush1.msra.mxu0 0.0
      %467 = vmatprep.subr.mxu0 0.0
      %468 = vmatpush1.msra.mxu0 0.0
      %469 = vmatprep.subr.mxu0 0.0
      %470 = vmatpush1.msra.mxu0 0.0
      %471 = vmatprep.subr.mxu0 0.0
      %472 = vmatpush1.msra.mxu0 0.0
      %473 = vmatprep.subr.mxu0 0.0
      %474 = vmatpush1.msra.mxu0 0.0
      %475 = vmatprep.subr.mxu0 0.0
      %476 = vmatpush1.msra.mxu0 0.0
      %477 = vmatprep.subr.mxu0 0.0
      %478 = vmatpush1.msra.mxu0 0.0
      %479 = vmatprep.subr.mxu0 0.0
      %480 = vmatpush1.msra.mxu0 0.0
      %481 = vmatprep.subr.mxu0 0.0
      %482 = vmatpush1.msra.mxu0 0.0
      %483 = vmatprep.subr.mxu0 0.0
      %484 = vmatpush1.msra.mxu0 0.0
      %485 = vmatprep.subr.mxu0 0.0
      %486 = vmatpush1.msra.mxu0 0.0
      %487 = vmatprep.subr.mxu0 0.0
      %488 = vmatpush1.msra.mxu0 0.0
      %489 = vmatprep.subr.mxu0 0.0
      %490 = vmatpush1.msra.mxu0 0.0
      %491 = vmatprep.subr.mxu0 0.0
      %492 = vmatpush1.msra.mxu0 0.0
      %493 = vmatprep.subr.mxu0 0.0
      %494 = vmatpush1.msra.mxu0 0.0
      %495 = vmatprep.subr.mxu0 0.0
      %496 = vmatpush1.msra.mxu0 0.0
      %497 = vmatprep.subr.mxu0 0.0
      %498 = vmatpush1.msra.mxu0 0.0
      %499 = vmatprep.subr.mxu0 0.0
      %500 = vmatpush1.msra.mxu0 0.0
      %501 = vmatprep.subr.mxu0 0.0
      %502 = vmatpush1.msra.mxu0 0.0
      %503 = vmatprep.subr.mxu0 0.0
      %504 = vmatpush1.msra.mxu0 0.0
      %505 = vmatprep.subr.mxu0 0.0
      %506 = vmatpush1.msra.mxu0 0.0
      %507 = vmatprep.subr.mxu0 0.0
      %508 = vmatpush1.msra.mxu0 0.0
      %509 = vmatprep.subr.mxu0 0.0
      %510 = vmatpush1.msra.mxu0 0.0
      %511 = vmatprep.subr.mxu0 0.0
      %512 = vmatpush1.msra.mxu0 0.0
      %513 = vmatprep.subr.mxu0 0.0
      %514 = vmatpush1.msra.mxu0 0.0
      %515 = vmatprep.mubr.f32.mxu0 0.0
      %516 = vmatmul.mubr.f32.gmra.mrb[0].mxu0 %v440
      %v517 = vpop.f32.mrb[0].mxu0
      %v518 = vadd.f32 %v421, %v517
      %v519 = vpop.f32.mrb[0].mxu0
      %v520 = vadd.f32 %v421, %v519
      %521 = vmatprep.mubr.f32.mxu0 0.0
      %522 = vmatmul.mubr.f32.gmra.mrb[0].mxu0 %v443
      %v523 = vpop.f32.mrb[0].mxu0
      %v524 = vadd.f32 %v426, %v523
      %v525 = vpop.f32.mrb[0].mxu0
      %v526 = vadd.f32 %v426, %v525
      %527 = vmatprep.mubr.f32.mxu0 0.0
      %528 = vmatmul.mubr.f32.gmra.mrb[0].mxu0 %v446
      %v529 = vpop.f32.mrb[0].mxu0
      %v530 = vadd.f32 %v431, %v529
      %v531 = vpop.f32.mrb[0].mxu0
      %v532 = vadd.f32 %v431, %v531
      %533 = vmatprep.mubr.f32.mxu0 0.0
      %534 = vmatmul.mubr.f32.gmra.mrb[0].mxu0 %v449
      %v535 = vpop.f32.mrb[0].mxu0
      %v536 = vadd.f32 %v436, %v535
      %v537 = vpop.f32.mrb[0].mxu0
      %v538 = vadd.f32 %v436, %v537
      %539 = vdwg.mxu0
      %v540 = vmax.f32 %v518, 0.0
      %v541 = vmax.f32 %v520, 0.0
      %v542 = vmax.f32 %v524, 0.0
      %v543 = vmax.f32 %v526, 0.0
      %v544 = vmax.f32 %v530, 0.0
      %v545 = vmax.f32 %v532, 0.0
      %v546 = vmax.f32 %v536, 0.0
      %v547 = vmax.f32 %v538, 0.0
      %548 = vst [vmem:[%s262] sm:$0xff] %v540
      %549 = vst [vmem:[%s262 + $0x8] sm:$0xff] %v541
      %550 = vst [vmem:[%s262 + $0x10] sm:$0xff] %v542
      %551 = vst [vmem:[%s262 + $0x18] sm:$0xff] %v543
      %552 = vst [vmem:[%s262 + $0x20] sm:$0xff] %v544
      %553 = vst [vmem:[%s262 + $0x28] sm:$0xff] %v545
      %554 = vst [vmem:[%s262 + $0x30] sm:$0xff] %v546
      %555 = vst [vmem:[%s262 + $0x38] sm:$0xff] %v547
      %s556 = smul.u32 2, %s21
      %p557 = scmp.lt.s32.totalorder %s20, 1
      %s558 = scalar_select %p557, %s20, 1
      %p559 = scmp.lt.s32.totalorder %s556, 1
      %s560 = scalar_select %p559, %s556, 1
      %s561 = smul.addr %s558, 8
      %s562 = sadd.s32 %s560, %s561
      %s563 = smul.addr %s562, 8
      %s564 = scalar_lea.vmem %s5, %s563
      // Predicated region
      $region41: #{feedforward_pallas.1} parent=39 // pred_check
        %p565 = pneg %p160
      $region42: #{feedforward_pallas.1} parent=39 // pred_check_branch
        %567 = sbr.rel (%p565) target = $region44
      $region43: #{feedforward_pallas.1} parent=39 // pred_region
        %s568 = smul.u32 2, %s21
      $region44: #{feedforward_pallas.1} parent=39 // pred_fallthru
        _
    $region40: #{feedforward_pallas.1} parent=5 // pred_fallthru
      _
    %p569 = scmp.le.s32.totalorder 2, %s11
    // Predicated region
    $region45: #{feedforward_pallas.1} parent=5 // pred_check
      %p570 = pneg %p569
    $region46: #{feedforward_pallas.1} parent=5 // pred_check_branch
      %572 = sbr.rel (%p570) target = $region48
    $region47: #{feedforward_pallas.1} parent=5 // pred_region
      %s573 = ssub.s32 %s11, 2
      // Predicated region
      $region49: #{feedforward_pallas.1} parent=47 // pred_check
        %p574 = pneg %p166
      $region50: #{feedforward_pallas.1} parent=47 // pred_check_branch
        %576 = sbr.rel (%p574) target = $region52
      $region51: #{feedforward_pallas.1} parent=47 // pred_region
        %s577 = smul.u32 2, %s23
        %p578 = scmp.lt.s32.totalorder %s22, 1
        %s579 = scalar_select %p578, %s22, 1
        %p580 = scmp.lt.s32.totalorder %s577, 1
        %s581 = scalar_select %p580, %s577, 1
        %s582 = smul.addr %s579, 8
        %s583 = sadd.s32 %s581, %s582
        %s584 = smul.addr %s583, 8
        %s585 = scalar_lea.vmem %s5, %s584
      $region52: #{feedforward_pallas.1} parent=47 // pred_fallthru
        _
    $region48: #{feedforward_pallas.1} parent=5 // pred_fallthru
      _
  $region6: #{feedforward_pallas.1} parent=0 // loop_footer
    %s15 = sadd.s32 1, %s11
  $region7: #{feedforward_pallas.1} parent=0 // loop_footer_branch
    %10 = sbr.rel target = $region3
  $region8: #{feedforward_pallas.1} parent=0 // loop_exit
    _

</llo_original>
